<compile_context>
chip_gen: v7x
topology: tpu7x:2x2x1
jax: 0.10.0
libtpu: 0.0.40
codegen_flags: <defaults>
</compile_context>

<pallas_src>
import functools
import math

import jax
import jax.numpy as jnp
from jax.experimental import pallas as pl
from jax.experimental.pallas import tpu as pltpu


def _gap_kernel(x_ref, o_ref, acc_ref, *, total_s, ts, mask_tail, inv_s, use_mxu):
    j = pl.program_id(1)
    last = pl.num_programs(1) - 1

    @pl.when(j == 0)
    def _init():
        acc_ref[...] = jnp.zeros_like(acc_ref)

    def _partial_sum(x):
        if use_mxu:
            # MXU ones-vector contraction: keeps the cross-lane reduce off the
            # XLU.  HIGHEST precision so f32 operands are not truncated to
            # bf16 (ones is exactly representable, accumulate is f32).
            ones = jnp.ones((x.shape[-1], 1), dtype=x.dtype)
            return jnp.dot(x, ones, preferred_element_type=jnp.float32,
                           precision=jax.lax.Precision.HIGHEST)
        return jnp.sum(x, axis=-1, keepdims=True, dtype=jnp.float32)

    x = x_ref[...]
    if mask_tail:
        # Only the last S block hangs past the array end; pay the mask there.
        @pl.when(j != last)
        def _bulk():
            acc_ref[...] += _partial_sum(x)

        @pl.when(j == last)
        def _tail():
            lane = jax.lax.broadcasted_iota(jnp.int32, x.shape, 1)
            valid = total_s - j * ts
            xm = jnp.where(lane < valid, x, jnp.zeros_like(x))
            acc_ref[...] += _partial_sum(xm)
    else:
        acc_ref[...] += _partial_sum(x)

    @pl.when(j == last)
    def _finalize():
        o_ref[...] = (acc_ref[...] * inv_s).astype(o_ref.dtype)


def _choose_tiles(n_rows, n_cols, itemsize, max_block_bytes):
    """Pick (TR, TS).  Prefer TS = S (contiguous DMA) and grow TR from the
    byte budget; only tile S when even a sublane-pack strip of a full row
    blows the budget.  Rounds to the dtype sublane pack."""
    pack = max(8, 32 // itemsize)          # f32 -> 8, bf16 -> 16, int8 -> 32
    row_bytes = n_cols * itemsize

    if pack * row_bytes <= max_block_bytes:
        # Common GAP case (small spatial, large N*C): full row per block.
        ts = n_cols
        tr_cap = (max_block_bytes // max(row_bytes, 1)) // pack * pack
        tr_cap = max(pack, tr_cap)
        tr = n_rows if n_rows <= tr_cap else tr_cap
    else:
        # Huge spatial extent: modest sublane-dense row strip, tile S.
        if n_rows <= pack:
            tr = n_rows
        else:
            tr = max(pack, (min(n_rows, 8 * pack) // pack) * pack)
        min_ts = max(128, -(-(512 // itemsize) // 128) * 128)   # >= 512 B bursts
        ts = (max_block_bytes // (tr * itemsize)) // 128 * 128
        ts = max(min_ts, ts)

    # Keep >= 2 row blocks when possible: the "parallel" row axis shards over
    # v7x's two TensorCores (one extra, cheap grid step on 1-TC chips).
    if tr == n_rows and n_rows >= 2 * pack:
        tr = -(-n_rows // 2)
        tr = -(-tr // pack) * pack
    return tr, ts


def global_average_pooling_single(x, *, max_block_bytes=6 * 1024 * 1024):
    """x: (N, C, *spatial) -> (N, C) mean over all spatial dims."""
    N, C = x.shape[0], x.shape[1]
    spatial = x.shape[2:]
    assert len(spatial) in (1, 2, 3), "GlobalAveragePooling dim must be in {1,2,3}"
    S = math.prod(spatial)
    R = N * C
    x_flat = x.reshape(R, S)              # contiguous reshape, no data movement

    itemsize = jnp.dtype(x.dtype).itemsize
    TR, TS = _choose_tiles(R, S, itemsize, max_block_bytes)
    num_r = -(-R // TR)
    num_s = -(-S // TS)
    mask_tail = (S % TS) != 0
    use_mxu = jnp.issubdtype(x.dtype, jnp.floating)

    kernel = functools.partial(
        _gap_kernel, total_s=S, ts=TS, mask_tail=mask_tail, inv_s=1.0 / S,
        use_mxu=use_mxu)

    out = pl.pallas_call(
        kernel,
        out_shape=jax.ShapeDtypeStruct((R, 1), x.dtype),
        grid_spec=pltpu.PrefetchScalarGridSpec(
            num_scalar_prefetch=0,
            grid=(num_r, num_s),
            in_specs=[pl.BlockSpec((TR, TS), lambda i, j: (i, j))],
            out_specs=pl.BlockSpec((TR, 1), lambda i, j: (i, 0)),
            scratch_shapes=[pltpu.VMEM((TR, 1), jnp.float32)],
        ),
        compiler_params=pltpu.CompilerParams(
            dimension_semantics=("parallel", "arbitrary"),
            vmem_limit_bytes=48 * 1024 * 1024,
        ),
    )(x_flat)
    return out.reshape(N, C)


def global_average_pooling(inputs):
    """Mirrors GlobalAveragePooling.forward: accepts an array or a tuple."""
    if isinstance(inputs, tuple):
        return tuple(global_average_pooling_single(x) for x in inputs)
    elif isinstance(inputs, (jnp.ndarray, jax.Array)):
        return global_average_pooling_single(inputs)
    else:
        raise TypeError("neck inputs should be tuple or jax array")


if __name__ == "__main__":
    key = jax.random.PRNGKey(0)
    k1, k2, k3, k4, k5 = jax.random.split(key, 5)

    # dim=2 case: NCHW input, small shapes.
    x = jax.random.normal(k1, (2, 4, 16, 16), dtype=jnp.float32)
    out = jax.block_until_ready(global_average_pooling(x))
    assert out.shape == (2, 4), out.shape
    ref = jnp.mean(x, axis=(2, 3))
    assert jnp.allclose(out, ref, atol=1e-5, rtol=1e-5)

    # Tuple input path (multi-level features, like the PyTorch neck).
    x2 = jax.random.normal(k2, (2, 8, 8, 8), dtype=jnp.float32)
    outs = jax.block_until_ready(global_average_pooling((x, x2)))
    assert outs[0].shape == (2, 4) and outs[1].shape == (2, 8)
    assert jnp.allclose(outs[1], jnp.mean(x2, axis=(2, 3)), atol=1e-5, rtol=1e-5)

    # Exercise the tiled-S accumulator path + last-step-only tail masking by
    # shrinking the per-block byte budget (S=200 -> TS=128, 2 S-steps).
    x3 = jax.random.normal(k3, (2, 4, 10, 20), dtype=jnp.float32)
    out3 = jax.block_until_ready(
        global_average_pooling_single(x3, max_block_bytes=4096))
    assert jnp.allclose(out3, jnp.mean(x3, axis=(2, 3)), atol=1e-5, rtol=1e-5)

    # Exercise the row-split path (R = N*C = 260 -> 2 row blocks, edge write).
    x4 = jax.random.normal(k4, (2, 130, 4, 4), dtype=jnp.float32)
    out4 = jax.block_until_ready(global_average_pooling_single(x4))
    assert out4.shape == (2, 130)
    assert jnp.allclose(out4, jnp.mean(x4, axis=(2, 3)), atol=1e-5, rtol=1e-5)

    # bf16 input: dtype-aware sublane pack (16) + MXU reduce + f32 accumulate.
    x5 = jax.random.normal(k5, (2, 64, 8, 8), dtype=jnp.bfloat16)
    out5 = jax.block_until_ready(global_average_pooling_single(x5))
    ref5 = jnp.mean(x5.astype(jnp.float32), axis=(2, 3)).astype(jnp.bfloat16)
    assert out5.shape == (2, 64)
    assert jnp.allclose(out5.astype(jnp.float32), ref5.astype(jnp.float32),
                        atol=1e-2, rtol=1e-2)

    # dim=1 and dim=3 cases.
    x6 = jax.random.normal(k1, (2, 4, 32), dtype=jnp.float32)
    out6 = jax.block_until_ready(global_average_pooling(x6))
    assert jnp.allclose(out6, jnp.mean(x6, axis=2), atol=1e-5, rtol=1e-5)
    x7 = jax.random.normal(k2, (2, 4, 4, 4, 4), dtype=jnp.float32)
    out7 = jax.block_until_ready(global_average_pooling(x7))
    assert jnp.allclose(out7, jnp.mean(x7, axis=(2, 3, 4)), atol=1e-5, rtol=1e-5)

    print("KERNEL_OK")
</pallas_src>

<mosaic_0001>
module attributes {stable_mosaic.version = 11 : i64} {
  func.func @_gap_kernel(%arg0: i32, %arg1: i32, %arg2: memref<8x256xf32, #tpu.memory_space<vmem>>, %arg3: memref<8x1xf32, #tpu.memory_space<vmem>>, %arg4: memref<8x1xf32, #tpu.memory_space<vmem>>) attributes {dimension_semantics = [#tpu.dimension_semantics<parallel>, #tpu.dimension_semantics<arbitrary>], iteration_bounds = array<i64: 1, 1>, scalar_prefetch = 0 : i64, scratch_operands = 1 : i64, tpu.core_type = #tpu.core_type<tc>, window_params = [{transform_indices = @transform_0, window_bounds = array<i64: 8, 256>}, {transform_indices = @transform_1, window_bounds = array<i64: 8, 1>}]} {
    %c0_i32 = arith.constant 0 : i32
    %0 = arith.cmpi eq, %arg1, %c0_i32 : i32
    %1 = arith.extui %0 : i1 to i32
    %c0_i32_0 = arith.constant 0 : i32
    %2 = arith.cmpi ne, %1, %c0_i32_0 : i32
    scf.if %2 {
      %cst_9 = arith.constant 0.000000e+00 : f32
      %12 = vector.broadcast %cst_9 : f32 to vector<8x1xf32>
      %c0_10 = arith.constant 0 : index
      %c0_11 = arith.constant 0 : index
      %13 = vector.load %arg4[%c0_10, %c0_11] : memref<8x1xf32, #tpu.memory_space<vmem>>, vector<8x1xf32>
      tpu.vector_store %arg4[%c0_10, %c0_11], %12 {strides = array<i32>} : memref<8x1xf32, #tpu.memory_space<vmem>>, vector<8x1xf32>,
    } else {
    }
    %c0 = arith.constant 0 : index
    %c0_1 = arith.constant 0 : index
    %3 = vector.load %arg2[%c0, %c0_1] : memref<8x256xf32, #tpu.memory_space<vmem>>, vector<8x256xf32>
    %c0_2 = arith.constant 0 : index
    %c0_3 = arith.constant 0 : index
    %4 = vector.load %arg4[%c0_2, %c0_3] : memref<8x1xf32, #tpu.memory_space<vmem>>, vector<8x1xf32>
    %cst = arith.constant 1.000000e+00 : f32
    %5 = vector.broadcast %cst : f32 to vector<256x1xf32>
    %cst_4 = arith.constant dense<0.000000e+00> : vector<8x1xf32>
    %6 = tpu.matmul %3, %5, %cst_4 {dimension_numbers = #tpu.dot_dimension_numbers<[1], [0], [0], [1], [0, 0, 1, 1], [], []>, precision = #tpu.contract_precision<fp32>} : vector<8x256xf32>, vector<256x1xf32>, vector<8x1xf32> -> vector<8x1xf32>
    %7 = arith.addf %4, %6 : vector<8x1xf32>
    %c0_5 = arith.constant 0 : index
    %c0_6 = arith.constant 0 : index
    %8 = vector.load %arg4[%c0_5, %c0_6] : memref<8x1xf32, #tpu.memory_space<vmem>>, vector<8x1xf32>
    tpu.vector_store %arg4[%c0_5, %c0_6], %7 {strides = array<i32>} : memref<8x1xf32, #tpu.memory_space<vmem>>, vector<8x1xf32>,
    %c0_i32_7 = arith.constant 0 : i32
    %9 = arith.cmpi eq, %arg1, %c0_i32_7 : i32
    %10 = arith.extui %9 : i1 to i32
    %c0_i32_8 = arith.constant 0 : i32
    %11 = arith.cmpi ne, %10, %c0_i32_8 : i32
    scf.if %11 {
      %c0_9 = arith.constant 0 : index
      %c0_10 = arith.constant 0 : index
      %12 = vector.load %arg4[%c0_9, %c0_10] : memref<8x1xf32, #tpu.memory_space<vmem>>, vector<8x1xf32>
      %cst_11 = arith.constant 3.906250e-03 : f32
      %13 = vector.broadcast %cst_11 : f32 to vector<8x1xf32>
      %14 = arith.mulf %12, %13 : vector<8x1xf32>
      %c0_12 = arith.constant 0 : index
      %c0_13 = arith.constant 0 : index
      %15 = vector.load %arg3[%c0_12, %c0_13] : memref<8x1xf32, #tpu.memory_space<vmem>>, vector<8x1xf32>
      tpu.vector_store %arg3[%c0_12, %c0_13], %14 {strides = array<i32>} : memref<8x1xf32, #tpu.memory_space<vmem>>, vector<8x1xf32>,
    } else {
    }
    return
  }
  func.func @transform_0(%arg0: i32, %arg1: i32) -> (i32, i32) {
    %c0_i32 = arith.constant 0 : i32
    return %arg0, %arg1 : i32, i32
  }
  func.func @transform_1(%arg0: i32, %arg1: i32) -> (i32, i32) {
    %c0_i32 = arith.constant 0 : i32
    %c0_i32_0 = arith.constant 0 : i32
    return %arg0, %c0_i32 : i32, i32
  }
}

</mosaic_0001>

<llo_original>
// kernel: tpu_custom_call.1
$region0: #{tpu_custom_call.1}
  #allocation0 [shape = 'u32[]', space=smem, size = 0x4, offset = 0x4, fixed_abs, tag = 'smem constant byte address 0x4 - core index']
  #allocation1 [shape = 'u32[144,128]{1,0:T(1,128)}', space=vmem, size = 0x12000, scoped, tag = 'internal scratch']
  #allocation2 [shape = 'f32[8,1]{1,0:T(8,128)}', space=vmem, size = 0x1000, scoped, tag = 'scratch operand']
  %s0 = inlined_call_operand.hbm [shape: f32[8,256], index: 0, kind: input, shape index: {}]
  %s1 = inlined_call_operand.vmem [shape: f32[8,1], index: 1, kind: output, shape index: {}]
  %s2 = sld [smem:[#allocation0]]
  $region26: #{tpu_custom_call.1} parent=0
    _
  %s4 = ssub.s32 1, %s2
  %s5 = scalar_select 0, %s4, %s2
  $region1: #{tpu_custom_call.1} parent=0
    #allocation3 [shape = 'u8[8192]{0}', space=vmem, size = 0x2000, scoped, tag = 'input window, operand 0, single buffered']
    #allocation4 [shape = 's32[1]{0}', space=sflag, size = 0x4, scoped, tag = 'scoped memory for tpu_custom_call.1']
    %6 = vsyncpa [#allocation4], 0
    // Predicated region
    $region2: #{tpu_custom_call.1} parent=1 // pred_check
      _
    $region3: #{tpu_custom_call.1} parent=1 // pred_check_branch
      %8 = sbr.rel (0) target = $region5
    $region4: #{tpu_custom_call.1} parent=1 // pred_region
      %s10 = ssub.s32 256, 256
      %11 = vsyncadd [#allocation4], %s10
      %s13 = sshll.u32 [#allocation3], 4
      %s14 = int_to_ptr.vmem [resolvable:$true] %s13
      %16 = dma.hbm_to_vmem [thread:$0]  %s0, 256, %s14, [#allocation4]
    $region5: #{tpu_custom_call.1} parent=1 // pred_fallthru
      _
    // Predicated region
    $region6: #{tpu_custom_call.1} parent=1 // pred_check
      _
    $region7: #{tpu_custom_call.1} parent=1 // pred_check_branch
      %18 = sbr.rel (0) target = $region9
    $region8: #{tpu_custom_call.1} parent=1 // pred_region
      %19 = dma.done [#allocation4], 256
    $region9: #{tpu_custom_call.1} parent=1 // pred_fallthru
      _
    %p20 = scmp.eq.s32.totalorder 0, 0
    // Predicated region
    $region10: #{tpu_custom_call.1} parent=1 // pred_check
      %p21 = pneg %p20
    $region11: #{tpu_custom_call.1} parent=1 // pred_check_branch
      %23 = sbr.rel (%p21) target = $region13
    $region12: #{tpu_custom_call.1} parent=1 // pred_region
      %vm24 = vcmask 7168
      %25 = vst.msk [vmem:[#allocation2] sm:$0xff] %vm24, 0.0
    $region13: #{tpu_custom_call.1} parent=1 // pred_fallthru
      _
    %v26 = vld [vmem:[#allocation3] sm:$0xff]
    %v27 = vld [vmem:[#allocation3 + $0x8] sm:$0xff]
    %v28 = vld [vmem:[#allocation2] sm:$0xff]
    %29 = vmatprep.subr.mxu0 0.0
    %30 = vmatpush1.msra.mxu0 1.0
    %31 = vmatprep.subr.mxu0 0.0
    %32 = vmatpush1.msra.mxu0 1.0
    %33 = vmatprep.subr.mxu0 0.0
    %34 = vmatpush1.msra.mxu0 1.0
    %35 = vmatprep.subr.mxu0 0.0
    %36 = vmatpush1.msra.mxu0 1.0
    %37 = vmatprep.subr.mxu0 0.0
    %38 = vmatpush1.msra.mxu0 1.0
    %39 = vmatprep.subr.mxu0 0.0
    %40 = vmatpush1.msra.mxu0 1.0
    %41 = vmatprep.subr.mxu0 0.0
    %42 = vmatpush1.msra.mxu0 1.0
    %43 = vmatprep.subr.mxu0 0.0
    %44 = vmatpush1.msra.mxu0 1.0
    %45 = vmatprep.subr.mxu0 0.0
    %46 = vmatpush1.msra.mxu0 1.0
    %47 = vmatprep.subr.mxu0 0.0
    %48 = vmatpush1.msra.mxu0 1.0
    %49 = vmatprep.subr.mxu0 0.0
    %50 = vmatpush1.msra.mxu0 1.0
    %51 = vmatprep.subr.mxu0 0.0
    %52 = vmatpush1.msra.mxu0 1.0
    %53 = vmatprep.subr.mxu0 0.0
    %54 = vmatpush1.msra.mxu0 1.0
    %55 = vmatprep.subr.mxu0 0.0
    %56 = vmatpush1.msra.mxu0 1.0
    %57 = vmatprep.subr.mxu0 0.0
    %58 = vmatpush1.msra.mxu0 1.0
    %59 = vmatprep.subr.mxu0 0.0
    %60 = vmatpush1.msra.mxu0 1.0
    %61 = vmatprep.subr.mxu0 0.0
    %62 = vmatpush1.msra.mxu0 1.0
    %63 = vmatprep.subr.mxu0 0.0
    %64 = vmatpush1.msra.mxu0 1.0
    %65 = vmatprep.subr.mxu0 0.0
    %66 = vmatpush1.msra.mxu0 1.0
    %67 = vmatprep.subr.mxu0 0.0
    %68 = vmatpush1.msra.mxu0 1.0
    %69 = vmatprep.subr.mxu0 0.0
    %70 = vmatpush1.msra.mxu0 1.0
    %71 = vmatprep.subr.mxu0 0.0
    %72 = vmatpush1.msra.mxu0 1.0
    %73 = vmatprep.subr.mxu0 0.0
    %74 = vmatpush1.msra.mxu0 1.0
    %75 = vmatprep.subr.mxu0 0.0
    %76 = vmatpush1.msra.mxu0 1.0
    %77 = vmatprep.subr.mxu0 0.0
    %78 = vmatpush1.msra.mxu0 1.0
    %79 = vmatprep.subr.mxu0 0.0
    %80 = vmatpush1.msra.mxu0 1.0
    %81 = vmatprep.subr.mxu0 0.0
    %82 = vmatpush1.msra.mxu0 1.0
    %83 = vmatprep.subr.mxu0 0.0
    %84 = vmatpush1.msra.mxu0 1.0
    %85 = vmatprep.subr.mxu0 0.0
    %86 = vmatpush1.msra.mxu0 1.0
    %87 = vmatprep.subr.mxu0 0.0
    %88 = vmatpush1.msra.mxu0 1.0
    %89 = vmatprep.subr.mxu0 0.0
    %90 = vmatpush1.msra.mxu0 1.0
    %91 = vmatprep.subr.mxu0 0.0
    %92 = vmatpush1.msra.mxu0 1.0
    %v93 = vand.u32 %v27, 4294901760
    %v94 = vsub.f32 %v27, %v93
    %v95 = vand.u32 %v94, 4294901760
    %v96 = vsub.f32 %v94, %v95
    %v97 = vand.u32 %v96, 4294901760
    %98 = vmatprep.mubr.f32.mxu0 %v97
    %v99 = vand.u32 %v26, 4294901760
    %v100 = vsub.f32 %v26, %v99
    %v101 = vand.u32 %v100, 4294901760
    %v102 = vsub.f32 %v100, %v101
    %v103 = vand.u32 %v102, 4294901760
    %104 = vmatmul.mubr.f32.gmra.mrb[0].mxu0 %v103
    %v105 = vpop.f32.mrb[0].mxu0
    %v106 = vadd.f32 0.0, %v105
    %v107 = vpop.f32.mrb[0].mxu0
    %108 = vdwg.mxu0
    %109 = vmatprep.subr.mxu0 0.0
    %110 = vmatpush1.msra.mxu0 0.0
    %111 = vmatprep.subr.mxu0 0.0
    %112 = vmatpush1.msra.mxu0 0.0
    %113 = vmatprep.subr.mxu0 0.0
    %114 = vmatpush1.msra.mxu0 0.0
    %115 = vmatprep.subr.mxu0 0.0
    %116 = vmatpush1.msra.mxu0 0.0
    %117 = vmatprep.subr.mxu0 0.0
    %118 = vmatpush1.msra.mxu0 0.0
    %119 = vmatprep.subr.mxu0 0.0
    %120 = vmatpush1.msra.mxu0 0.0
    %121 = vmatprep.subr.mxu0 0.0
    %122 = vmatpush1.msra.mxu0 0.0
    %123 = vmatprep.subr.mxu0 0.0
    %124 = vmatpush1.msra.mxu0 0.0
    %125 = vmatprep.subr.mxu0 0.0
    %126 = vmatpush1.msra.mxu0 0.0
    %127 = vmatprep.subr.mxu0 0.0
    %128 = vmatpush1.msra.mxu0 0.0
    %129 = vmatprep.subr.mxu0 0.0
    %130 = vmatpush1.msra.mxu0 0.0
    %131 = vmatprep.subr.mxu0 0.0
    %132 = vmatpush1.msra.mxu0 0.0
    %133 = vmatprep.subr.mxu0 0.0
    %134 = vmatpush1.msra.mxu0 0.0
    %135 = vmatprep.subr.mxu0 0.0
    %136 = vmatpush1.msra.mxu0 0.0
    %137 = vmatprep.subr.mxu0 0.0
    %138 = vmatpush1.msra.mxu0 0.0
    %139 = vmatprep.subr.mxu0 0.0
    %140 = vmatpush1.msra.mxu0 0.0
    %141 = vmatprep.subr.mxu0 0.0
    %142 = vmatpush1.msra.mxu0 0.0
    %143 = vmatprep.subr.mxu0 0.0
    %144 = vmatpush1.msra.mxu0 0.0
    %145 = vmatprep.subr.mxu0 0.0
    %146 = vmatpush1.msra.mxu0 0.0
    %147 = vmatprep.subr.mxu0 0.0
    %148 = vmatpush1.msra.mxu0 0.0
    %149 = vmatprep.subr.mxu0 0.0
    %150 = vmatpush1.msra.mxu0 0.0
    %151 = vmatprep.subr.mxu0 0.0
    %152 = vmatpush1.msra.mxu0 0.0
    %153 = vmatprep.subr.mxu0 0.0
    %154 = vmatpush1.msra.mxu0 0.0
    %155 = vmatprep.subr.mxu0 0.0
    %156 = vmatpush1.msra.mxu0 0.0
    %157 = vmatprep.subr.mxu0 0.0
    %158 = vmatpush1.msra.mxu0 0.0
    %159 = vmatprep.subr.mxu0 0.0
    %160 = vmatpush1.msra.mxu0 0.0
    %161 = vmatprep.subr.mxu0 0.0
    %162 = vmatpush1.msra.mxu0 0.0
    %163 = vmatprep.subr.mxu0 0.0
    %164 = vmatpush1.msra.mxu0 0.0
    %165 = vmatprep.subr.mxu0 0.0
    %166 = vmatpush1.msra.mxu0 0.0
    %167 = vmatprep.subr.mxu0 0.0
    %168 = vmatpush1.msra.mxu0 0.0
    %169 = vmatprep.subr.mxu0 0.0
    %170 = vmatpush1.msra.mxu0 0.0
    %171 = vmatprep.subr.mxu0 0.0
    %172 = vmatpush1.msra.mxu0 0.0
    %v173 = vand.u32 %v27, 4294901760
    %174 = vmatprep.mubr.f32.mxu0 %v173
    %v175 = vand.u32 %v26, 4294901760
    %176 = vmatmul.mubr.f32.gmra.mrb[0].mxu0 %v175
    %v177 = vpop.f32.mrb[0].mxu0
    %v178 = vadd.f32 %v106, %v177
    %v179 = vpop.f32.mrb[0].mxu0
    %180 = vdwg.mxu0
    %181 = vmatprep.subr.mxu0 0.0
    %182 = vmatpush1.msra.mxu0 0.0
    %183 = vmatprep.subr.mxu0 0.0
    %184 = vmatpush1.msra.mxu0 0.0
    %185 = vmatprep.subr.mxu0 0.0
    %186 = vmatpush1.msra.mxu0 0.0
    %187 = vmatprep.subr.mxu0 0.0
    %188 = vmatpush1.msra.mxu0 0.0
    %189 = vmatprep.subr.mxu0 0.0
    %190 = vmatpush1.msra.mxu0 0.0
    %191 = vmatprep.subr.mxu0 0.0
    %192 = vmatpush1.msra.mxu0 0.0
    %193 = vmatprep.subr.mxu0 0.0
    %194 = vmatpush1.msra.mxu0 0.0
    %195 = vmatprep.subr.mxu0 0.0
    %196 = vmatpush1.msra.mxu0 0.0
    %197 = vmatprep.subr.mxu0 0.0
    %198 = vmatpush1.msra.mxu0 0.0
    %199 = vmatprep.subr.mxu0 0.0
    %200 = vmatpush1.msra.mxu0 0.0
    %201 = vmatprep.subr.mxu0 0.0
    %202 = vmatpush1.msra.mxu0 0.0
    %203 = vmatprep.subr.mxu0 0.0
    %204 = vmatpush1.msra.mxu0 0.0
    %205 = vmatprep.subr.mxu0 0.0
    %206 = vmatpush1.msra.mxu0 0.0
    %207 = vmatprep.subr.mxu0 0.0
    %208 = vmatpush1.msra.mxu0 0.0
    %209 = vmatprep.subr.mxu0 0.0
    %210 = vmatpush1.msra.mxu0 0.0
    %211 = vmatprep.subr.mxu0 0.0
    %212 = vmatpush1.msra.mxu0 0.0
    %213 = vmatprep.subr.mxu0 0.0
    %214 = vmatpush1.msra.mxu0 0.0
    %215 = vmatprep.subr.mxu0 0.0
    %216 = vmatpush1.msra.mxu0 0.0
    %217 = vmatprep.subr.mxu0 0.0
    %218 = vmatpush1.msra.mxu0 0.0
    %219 = vmatprep.subr.mxu0 0.0
    %220 = vmatpush1.msra.mxu0 0.0
    %221 = vmatprep.subr.mxu0 0.0
    %222 = vmatpush1.msra.mxu0 0.0
    %223 = vmatprep.subr.mxu0 0.0
    %224 = vmatpush1.msra.mxu0 0.0
    %225 = vmatprep.subr.mxu0 0.0
    %226 = vmatpush1.msra.mxu0 0.0
    %227 = vmatprep.subr.mxu0 0.0
    %228 = vmatpush1.msra.mxu0 0.0
    %229 = vmatprep.subr.mxu0 0.0
    %230 = vmatpush1.msra.mxu0 0.0
    %231 = vmatprep.subr.mxu0 0.0
    %232 = vmatpush1.msra.mxu0 0.0
    %233 = vmatprep.subr.mxu0 0.0
    %234 = vmatpush1.msra.mxu0 0.0
    %235 = vmatprep.subr.mxu0 0.0
    %236 = vmatpush1.msra.mxu0 0.0
    %237 = vmatprep.subr.mxu0 0.0
    %238 = vmatpush1.msra.mxu0 0.0
    %239 = vmatprep.subr.mxu0 0.0
    %240 = vmatpush1.msra.mxu0 0.0
    %241 = vmatprep.subr.mxu0 0.0
    %242 = vmatpush1.msra.mxu0 0.0
    %243 = vmatprep.subr.mxu0 0.0
    %244 = vmatpush1.msra.mxu0 0.0
    %v245 = vand.u32 %v27, 4294901760
    %v246 = vsub.f32 %v27, %v245
    %247 = vmatprep.mubr.f32.mxu0 %v246
    %v248 = vand.u32 %v26, 4294901760
    %v249 = vsub.f32 %v26, %v248
    %250 = vmatmul.mubr.f32.gmra.mrb[0].mxu0 %v249
    %v251 = vpop.f32.mrb[0].mxu0
    %v252 = vadd.f32 %v178, %v251
    %v253 = vpop.f32.mrb[0].mxu0
    %254 = vdwg.mxu0
    %255 = vmatprep.subr.mxu0 0.0
    %256 = vmatpush1.msra.mxu0 1.0
    %257 = vmatprep.subr.mxu0 0.0
    %258 = vmatpush1.msra.mxu0 1.0
    %259 = vmatprep.subr.mxu0 0.0
    %260 = vmatpush1.msra.mxu0 1.0
    %261 = vmatprep.subr.mxu0 0.0
    %262 = vmatpush1.msra.mxu0 1.0
    %263 = vmatprep.subr.mxu0 0.0
    %264 = vmatpush1.msra.mxu0 1.0
    %265 = vmatprep.subr.mxu0 0.0
    %266 = vmatpush1.msra.mxu0 1.0
    %267 = vmatprep.subr.mxu0 0.0
    %268 = vmatpush1.msra.mxu0 1.0
    %269 = vmatprep.subr.mxu0 0.0
    %270 = vmatpush1.msra.mxu0 1.0
    %271 = vmatprep.subr.mxu0 0.0
    %272 = vmatpush1.msra.mxu0 1.0
    %273 = vmatprep.subr.mxu0 0.0
    %274 = vmatpush1.msra.mxu0 1.0
    %275 = vmatprep.subr.mxu0 0.0
    %276 = vmatpush1.msra.mxu0 1.0
    %277 = vmatprep.subr.mxu0 0.0
    %278 = vmatpush1.msra.mxu0 1.0
    %279 = vmatprep.subr.mxu0 0.0
    %280 = vmatpush1.msra.mxu0 1.0
    %281 = vmatprep.subr.mxu0 0.0
    %282 = vmatpush1.msra.mxu0 1.0
    %283 = vmatprep.subr.mxu0 0.0
    %284 = vmatpush1.msra.mxu0 1.0
    %285 = vmatprep.subr.mxu0 0.0
    %286 = vmatpush1.msra.mxu0 1.0
    %287 = vmatprep.subr.mxu0 0.0
    %288 = vmatpush1.msra.mxu0 1.0
    %289 = vmatprep.subr.mxu0 0.0
    %290 = vmatpush1.msra.mxu0 1.0
    %291 = vmatprep.subr.mxu0 0.0
    %292 = vmatpush1.msra.mxu0 1.0
    %293 = vmatprep.subr.mxu0 0.0
    %294 = vmatpush1.msra.mxu0 1.0
    %295 = vmatprep.subr.mxu0 0.0
    %296 = vmatpush1.msra.mxu0 1.0
    %297 = vmatprep.subr.mxu0 0.0
    %298 = vmatpush1.msra.mxu0 1.0
    %299 = vmatprep.subr.mxu0 0.0
    %300 = vmatpush1.msra.mxu0 1.0
    %301 = vmatprep.subr.mxu0 0.0
    %302 = vmatpush1.msra.mxu0 1.0
    %303 = vmatprep.subr.mxu0 0.0
    %304 = vmatpush1.msra.mxu0 1.0
    %305 = vmatprep.subr.mxu0 0.0
    %306 = vmatpush1.msra.mxu0 1.0
    %307 = vmatprep.subr.mxu0 0.0
    %308 = vmatpush1.msra.mxu0 1.0
    %309 = vmatprep.subr.mxu0 0.0
    %310 = vmatpush1.msra.mxu0 1.0
    %311 = vmatprep.subr.mxu0 0.0
    %312 = vmatpush1.msra.mxu0 1.0
    %313 = vmatprep.subr.mxu0 0.0
    %314 = vmatpush1.msra.mxu0 1.0
    %315 = vmatprep.subr.mxu0 0.0
    %316 = vmatpush1.msra.mxu0 1.0
    %317 = vmatprep.subr.mxu0 0.0
    %318 = vmatpush1.msra.mxu0 1.0
    %v319 = vand.u32 %v27, 4294901760
    %v320 = vsub.f32 %v27, %v319
    %v321 = vand.u32 %v320, 4294901760
    %322 = vmatprep.mubr.f32.mxu0 %v321
    %v323 = vand.u32 %v26, 4294901760
    %v324 = vsub.f32 %v26, %v323
    %v325 = vand.u32 %v324, 4294901760
    %326 = vmatmul.mubr.f32.gmra.mrb[0].mxu0 %v325
    %v327 = vpop.f32.mrb[0].mxu0
    %v328 = vadd.f32 %v252, %v327
    %v329 = vpop.f32.mrb[0].mxu0
    %330 = vdwg.mxu0
    %331 = vmatprep.subr.mxu0 0.0
    %332 = vmatpush1.msra.mxu0 0.0
    %333 = vmatprep.subr.mxu0 0.0
    %334 = vmatpush1.msra.mxu0 0.0
    %335 = vmatprep.subr.mxu0 0.0
    %336 = vmatpush1.msra.mxu0 0.0
    %337 = vmatprep.subr.mxu0 0.0
    %338 = vmatpush1.msra.mxu0 0.0
    %339 = vmatprep.subr.mxu0 0.0
    %340 = vmatpush1.msra.mxu0 0.0
    %341 = vmatprep.subr.mxu0 0.0
    %342 = vmatpush1.msra.mxu0 0.0
    %343 = vmatprep.subr.mxu0 0.0
    %344 = vmatpush1.msra.mxu0 0.0
    %345 = vmatprep.subr.mxu0 0.0
    %346 = vmatpush1.msra.mxu0 0.0
    %347 = vmatprep.subr.mxu0 0.0
    %348 = vmatpush1.msra.mxu0 0.0
    %349 = vmatprep.subr.mxu0 0.0
    %350 = vmatpush1.msra.mxu0 0.0
    %351 = vmatprep.subr.mxu0 0.0
    %352 = vmatpush1.msra.mxu0 0.0
    %353 = vmatprep.subr.mxu0 0.0
    %354 = vmatpush1.msra.mxu0 0.0
    %355 = vmatprep.subr.mxu0 0.0
    %356 = vmatpush1.msra.mxu0 0.0
    %357 = vmatprep.subr.mxu0 0.0
    %358 = vmatpush1.msra.mxu0 0.0
    %359 = vmatprep.subr.mxu0 0.0
    %360 = vmatpush1.msra.mxu0 0.0
    %361 = vmatprep.subr.mxu0 0.0
    %362 = vmatpush1.msra.mxu0 0.0
    %363 = vmatprep.subr.mxu0 0.0
    %364 = vmatpush1.msra.mxu0 0.0
    %365 = vmatprep.subr.mxu0 0.0
    %366 = vmatpush1.msra.mxu0 0.0
    %367 = vmatprep.subr.mxu0 0.0
    %368 = vmatpush1.msra.mxu0 0.0
    %369 = vmatprep.subr.mxu0 0.0
    %370 = vmatpush1.msra.mxu0 0.0
    %371 = vmatprep.subr.mxu0 0.0
    %372 = vmatpush1.msra.mxu0 0.0
    %373 = vmatprep.subr.mxu0 0.0
    %374 = vmatpush1.msra.mxu0 0.0
    %375 = vmatprep.subr.mxu0 0.0
    %376 = vmatpush1.msra.mxu0 0.0
    %377 = vmatprep.subr.mxu0 0.0
    %378 = vmatpush1.msra.mxu0 0.0
    %379 = vmatprep.subr.mxu0 0.0
    %380 = vmatpush1.msra.mxu0 0.0
    %381 = vmatprep.subr.mxu0 0.0
    %382 = vmatpush1.msra.mxu0 0.0
    %383 = vmatprep.subr.mxu0 0.0
    %384 = vmatpush1.msra.mxu0 0.0
    %385 = vmatprep.subr.mxu0 0.0
    %386 = vmatpush1.msra.mxu0 0.0
    %387 = vmatprep.subr.mxu0 0.0
    %388 = vmatpush1.msra.mxu0 0.0
    %389 = vmatprep.subr.mxu0 0.0
    %390 = vmatpush1.msra.mxu0 0.0
    %391 = vmatprep.subr.mxu0 0.0
    %392 = vmatpush1.msra.mxu0 0.0
    %393 = vmatprep.subr.mxu0 0.0
    %394 = vmatpush1.msra.mxu0 0.0
    %v395 = vand.u32 %v27, 4294901760
    %396 = vmatprep.mubr.f32.mxu0 %v395
    %v397 = vand.u32 %v26, 4294901760
    %398 = vmatmul.mubr.f32.gmra.mrb[0].mxu0 %v397
    %v399 = vpop.f32.mrb[0].mxu0
    %v400 = vadd.f32 %v328, %v399
    %v401 = vpop.f32.mrb[0].mxu0
    %402 = vdwg.mxu0
    %403 = vmatprep.subr.mxu0 0.0
    %404 = vmatpush1.msra.mxu0 1.0
    %405 = vmatprep.subr.mxu0 0.0
    %406 = vmatpush1.msra.mxu0 1.0
    %407 = vmatprep.subr.mxu0 0.0
    %408 = vmatpush1.msra.mxu0 1.0
    %409 = vmatprep.subr.mxu0 0.0
    %410 = vmatpush1.msra.mxu0 1.0
    %411 = vmatprep.subr.mxu0 0.0
    %412 = vmatpush1.msra.mxu0 1.0
    %413 = vmatprep.subr.mxu0 0.0
    %414 = vmatpush1.msra.mxu0 1.0
    %415 = vmatprep.subr.mxu0 0.0
    %416 = vmatpush1.msra.mxu0 1.0
    %417 = vmatprep.subr.mxu0 0.0
    %418 = vmatpush1.msra.mxu0 1.0
    %419 = vmatprep.subr.mxu0 0.0
    %420 = vmatpush1.msra.mxu0 1.0
    %421 = vmatprep.subr.mxu0 0.0
    %422 = vmatpush1.msra.mxu0 1.0
    %423 = vmatprep.subr.mxu0 0.0
    %424 = vmatpush1.msra.mxu0 1.0
    %425 = vmatprep.subr.mxu0 0.0
    %426 = vmatpush1.msra.mxu0 1.0
    %427 = vmatprep.subr.mxu0 0.0
    %428 = vmatpush1.msra.mxu0 1.0
    %429 = vmatprep.subr.mxu0 0.0
    %430 = vmatpush1.msra.mxu0 1.0
    %431 = vmatprep.subr.mxu0 0.0
    %432 = vmatpush1.msra.mxu0 1.0
    %433 = vmatprep.subr.mxu0 0.0
    %434 = vmatpush1.msra.mxu0 1.0
    %435 = vmatprep.subr.mxu0 0.0
    %436 = vmatpush1.msra.mxu0 1.0
    %437 = vmatprep.subr.mxu0 0.0
    %438 = vmatpush1.msra.mxu0 1.0
    %439 = vmatprep.subr.mxu0 0.0
    %440 = vmatpush1.msra.mxu0 1.0
    %441 = vmatprep.subr.mxu0 0.0
    %442 = vmatpush1.msra.mxu0 1.0
    %443 = vmatprep.subr.mxu0 0.0
    %444 = vmatpush1.msra.mxu0 1.0
    %445 = vmatprep.subr.mxu0 0.0
    %446 = vmatpush1.msra.mxu0 1.0
    %447 = vmatprep.subr.mxu0 0.0
    %448 = vmatpush1.msra.mxu0 1.0
    %449 = vmatprep.subr.mxu0 0.0
    %450 = vmatpush1.msra.mxu0 1.0
    %451 = vmatprep.subr.mxu0 0.0
    %452 = vmatpush1.msra.mxu0 1.0
    %453 = vmatprep.subr.mxu0 0.0
    %454 = vmatpush1.msra.mxu0 1.0
    %455 = vmatprep.subr.mxu0 0.0
    %456 = vmatpush1.msra.mxu0 1.0
    %457 = vmatprep.subr.mxu0 0.0
    %458 = vmatpush1.msra.mxu0 1.0
    %459 = vmatprep.subr.mxu0 0.0
    %460 = vmatpush1.msra.mxu0 1.0
    %461 = vmatprep.subr.mxu0 0.0
    %462 = vmatpush1.msra.mxu0 1.0
    %463 = vmatprep.subr.mxu0 0.0
    %464 = vmatpush1.msra.mxu0 1.0
    %465 = vmatprep.subr.mxu0 0.0
    %466 = vmatpush1.msra.mxu0 1.0
    %v467 = vand.u32 %v27, 4294901760
    %468 = vmatprep.mubr.f32.mxu0 %v467
    %v469 = vand.u32 %v26, 4294901760
    %470 = vmatmul.mubr.f32.gmra.mrb[0].mxu0 %v469
    %v471 = vpop.f32.mrb[0].mxu0
    %v472 = vadd.f32 %v400, %v471
    %v473 = vpop.f32.mrb[0].mxu0
    %474 = vdwg.mxu0
    %v475 = vadd.f32 %v28, %v472
    %vm476 = vcmask 7168
    %477 = vst.msk [vmem:[#allocation2] sm:$0xff] %vm476, %v475
    // Predicated region
    $region14: #{tpu_custom_call.1} parent=1 // pred_check
      %p478 = pneg %p20
    $region15: #{tpu_custom_call.1} parent=1 // pred_check_branch
      %480 = sbr.rel (%p478) target = $region17
    $region16: #{tpu_custom_call.1} parent=1 // pred_region
      %v481 = vld [vmem:[#allocation2] sm:$0xff]
      %v482 = vmul.f32 %v481, 0.00390625
      %483 = vst.msk [vmem:[%s1] sm:$0xff] %vm476, %v482
    $region17: #{tpu_custom_call.1} parent=1 // pred_fallthru
      _
    // Predicated region
    $region18: #{tpu_custom_call.1} parent=1 // pred_check
      _
    $region19: #{tpu_custom_call.1} parent=1 // pred_check_branch
      %485 = sbr.rel (0) target = $region21
    $region20: #{tpu_custom_call.1} parent=1 // pred_region
      _
    $region21: #{tpu_custom_call.1} parent=1 // pred_fallthru
      _
    // Predicated region
    $region22: #{tpu_custom_call.1} parent=1 // pred_check
      _
    $region23: #{tpu_custom_call.1} parent=1 // pred_check_branch
      %487 = sbr.rel (0) target = $region25
    $region24: #{tpu_custom_call.1} parent=1 // pred_region
      _
    $region25: #{tpu_custom_call.1} parent=1 // pred_fallthru
      _
    %488 = vsyncpa [#allocation4], 1

</llo_original>
